<compile_context>
chip_gen: v7x
topology: tpu7x:2x2x1
jax: 0.10.0
libtpu: 0.0.40
codegen_flags: <defaults>
</compile_context>

<pallas_src>
import jax
import jax.numpy as jnp
from jax.experimental import pallas as pl
from jax.experimental.pallas import tpu as pltpu


def _round_up(x, m):
    return ((x + m - 1) // m) * m


def _make_snetwork_kernel(num_hidden, activation):
    """Kernel ref order: x, W0, b_stack, [W_hidden_stack], WfT, bf, out."""
    if activation in ("relu", "tanh"):
        # The reference nn.Module maps both 'relu' and 'tanh' to nn.ReLU().
        def act(h):
            return jnp.maximum(h, 0.0)
    elif activation == "lrelu":
        def act(h):
            return jnp.where(h > 0.0, h, 0.01 * h)
    else:
        raise ValueError(f"unknown activation: {activation}")

    def kernel(*refs):
        if num_hidden > 0:
            x_ref, w0_ref, b01_ref, wh_ref, wft_ref, bf_ref, o_ref = refs
        else:
            x_ref, w0_ref, b01_ref, wft_ref, bf_ref, o_ref = refs
            wh_ref = None

        f32 = jnp.float32
        x = x_ref[...]                                   # (D, TB), batch on lanes
        w0 = w0_ref[...]                                 # (H, D)
        d_in = x.shape[0]

        # ---- first layer: K = D is tiny -> VPU broadcast MACs, no MXU pass ----
        h = w0[:, 0:1].astype(f32) * x[0:1, :].astype(f32)           # (H, TB)
        for k in range(1, d_in):
            h = h + w0[:, k:k + 1].astype(f32) * x[k:k + 1, :].astype(f32)
        h = act(h + b01_ref[0].astype(f32))                          # (H,1) bias

        # ---- hidden layers: (H, H) @ (H, TB) on the MXU, f32 accumulate ----
        for li in range(num_hidden):
            w = wh_ref[li]                                           # (H, H)
            h = jnp.dot(w, h.astype(w.dtype), preferred_element_type=f32)
            h = act(h + b01_ref[li + 1].astype(f32))

        # ---- final layer: M = D is tiny -> keep it off the MXU ----
        # o[d, b] = sum_j WfT[j, d] * h[j, b]  : sublane-scaled multiply
        # (lane-broadcast of a (H,1) column) + cross-sublane reduction (XLU).
        wft = wft_ref[...].astype(f32)                               # (H, D)
        d_out = wft.shape[1]
        cols = [jnp.sum(h * wft[:, d:d + 1], axis=0, keepdims=True)  # (1, TB)
                for d in range(d_out)]
        o = cols[0] if d_out == 1 else jnp.concatenate(cols, axis=0)  # (D, TB)
        o = jnp.tanh(o + bf_ref[...].astype(f32))
        o_ref[...] = o.astype(o_ref.dtype)                           # lane-dense store

    return kernel


def _choose_batch_tile(batch, block_batch):
    """Pick the batch tile (lane count per grid step)."""
    if batch <= 128:
        # Single exact block (block dims equal full array dims -> always legal).
        return batch
    block_batch = max(128, _round_up(block_batch, 128))
    tb = min(block_batch, _round_up(batch, 128))
    # Keep >= 2 grid steps so v7x megacore ("parallel" axis) can use both TCs.
    tb = min(tb, _round_up(pl.cdiv(batch, 2), 128))
    return tb


def snetwork_forward(x, weights, biases, *, activation="relu",
                     block_batch=2048, param_dtype=jnp.bfloat16):
    """SNetwork forward pass in a single Pallas TPU kernel.

    x:       (batch, inputDim) float32
    weights: list of PyTorch nn.Linear weights, each (out_features, in_features)
    biases:  list of (out_features,) float32 arrays
    param_dtype: storage / MXU-input dtype for weights (bf16 default -> native
                 single-pass MXU matmuls; accumulation stays float32).
    """
    assert len(weights) == len(biases) and len(weights) >= 2
    batch, input_dim = x.shape
    hidden_dim = weights[0].shape[0]
    num_hidden = len(weights) - 2

    tb = _choose_batch_tile(batch, block_batch)
    grid = (pl.cdiv(batch, tb),)

    # Lane-dense input: batch on the lane (last) axis.  No padding pass --
    # a ragged final tile is handled by Pallas (OOB reads are garbage but each
    # batch column is independent; OOB output writes are masked).
    x_t = x.T                                                        # (D, batch)

    # --- pack parameters into a few VMEM-resident operands ---------------------
    w0 = weights[0].astype(param_dtype)                              # (H, D)
    wft = weights[-1].T.astype(param_dtype)                          # (H, D)  (transposed)
    b01 = jnp.stack(list(biases[:-1])).astype(jnp.float32)           # (nh+1, H)
    b01 = b01.reshape(num_hidden + 1, hidden_dim, 1)                 # H on sublanes
    bf = biases[-1].astype(jnp.float32).reshape(input_dim, 1)

    operands = [x_t, w0, b01]
    in_specs = [
        pl.BlockSpec((input_dim, tb), lambda i: (0, i)),             # x tile
        pl.BlockSpec((hidden_dim, input_dim), lambda i: (0, 0)),     # W0 resident
        pl.BlockSpec((num_hidden + 1, hidden_dim, 1), lambda i: (0, 0, 0)),
    ]
    if num_hidden > 0:
        wh = jnp.stack(weights[1:-1]).astype(param_dtype)            # (nh, H, H)
        operands.append(wh)
        in_specs.append(
            pl.BlockSpec((num_hidden, hidden_dim, hidden_dim),
                         lambda i: (0, 0, 0)))
    operands += [wft, bf]
    in_specs += [
        pl.BlockSpec((hidden_dim, input_dim), lambda i: (0, 0)),     # WfT resident
        pl.BlockSpec((input_dim, 1), lambda i: (0, 0)),
    ]
    out_spec = pl.BlockSpec((input_dim, tb), lambda i: (0, i))

    # --- advisory cost estimate so XLA schedules the call sensibly -------------
    flops = 2 * batch * (input_dim * hidden_dim
                         + num_hidden * hidden_dim * hidden_dim
                         + hidden_dim * input_dim)
    param_bytes = int(w0.size) * w0.dtype.itemsize + int(wft.size) * wft.dtype.itemsize
    if num_hidden > 0:
        param_bytes += int(wh.size) * wh.dtype.itemsize
    param_bytes += int(b01.size) * 4 + int(bf.size) * 4
    cost = pl.CostEstimate(
        flops=int(flops),
        transcendentals=int(batch * input_dim),
        bytes_accessed=int(2 * batch * input_dim * 4 + param_bytes),
    )

    out_t = pl.pallas_call(
        _make_snetwork_kernel(num_hidden, activation),
        grid=grid,
        in_specs=in_specs,
        out_specs=out_spec,
        out_shape=jax.ShapeDtypeStruct((input_dim, batch), x.dtype),
        compiler_params=pltpu.CompilerParams(
            dimension_semantics=("parallel",)),   # v7x megacore splits batch tiles
        cost_estimate=cost,
    )(*operands)

    # Transpose back (wrapper-side layout plumbing only; no pad/slice passes).
    return out_t.T


def init_snetwork_params(key, input_dim, intermediate_dim, num_s_layers):
    """Deterministic init, PyTorch nn.Linear layout: W is (out, in), b is (out,)."""
    dims = [input_dim] + [intermediate_dim] * (num_s_layers + 1) + [input_dim]
    weights, biases = [], []
    for i in range(len(dims) - 1):
        key, wk, bk = jax.random.split(key, 3)
        fan_in, fan_out = dims[i], dims[i + 1]
        bound = 1.0 / (fan_in ** 0.5)
        w = jax.random.uniform(wk, (fan_out, fan_in), jnp.float32,
                               minval=-bound, maxval=bound)
        b = jax.random.uniform(bk, (fan_out,), jnp.float32,
                               minval=-bound, maxval=bound)
        weights.append(w)
        biases.append(b)
    return weights, biases


def snetwork_reference(x, weights, biases, activation="relu"):
    """Pure-JAX reference of the same forward pass (PyTorch weight layout)."""
    if activation in ("relu", "tanh"):
        act = lambda h: jnp.maximum(h, 0.0)
    else:
        act = lambda h: jnp.where(h > 0.0, h, 0.01 * h)
    h = x
    n = len(weights)
    for i, (w, b) in enumerate(zip(weights, biases)):
        h = h @ w.T + b
        h = act(h) if i < n - 1 else jnp.tanh(h)
    return h


if __name__ == "__main__":
    # Real-NVP-2D-flavoured shapes.
    input_dim = 2
    intermediate_dim = 32
    num_s_layers = 2

    key = jax.random.PRNGKey(0)
    key, xkey = jax.random.split(key)
    weights, biases = init_snetwork_params(
        key, input_dim, intermediate_dim, num_s_layers)

    # 1) Small batch, f32 params: single exact tile (tb = batch), tight check.
    x_small = jax.random.normal(xkey, (8, input_dim), dtype=jnp.float32)
    out_small = jax.block_until_ready(
        snetwork_forward(x_small, weights, biases, param_dtype=jnp.float32))
    ref_small = snetwork_reference(x_small, weights, biases)
    assert out_small.shape == (8, input_dim)
    assert jnp.allclose(out_small, ref_small, atol=1e-5, rtol=1e-5)

    # 2) Multi-tile batch with a ragged last tile, f32 params: tight check.
    #    (batch=300 -> tb=256, grid=2; exercises megacore cap + masked edge.)
    key, xkey2 = jax.random.split(key)
    x_big = jax.random.normal(xkey2, (300, input_dim), dtype=jnp.float32)
    out_big = jax.block_until_ready(
        snetwork_forward(x_big, weights, biases, param_dtype=jnp.float32))
    ref_big = snetwork_reference(x_big, weights, biases)
    assert out_big.shape == (300, input_dim)
    assert jnp.allclose(out_big, ref_big, atol=1e-5, rtol=1e-5)

    # 3) Default bf16 weight storage (single-pass MXU): loose tolerance.
    out_bf16 = jax.block_until_ready(snetwork_forward(x_big, weights, biases))
    assert out_bf16.shape == (300, input_dim)
    assert jnp.allclose(out_bf16, ref_big, atol=5e-2)

    # 4) LeakyReLU config, f32 params: tight check.
    out_lrelu = jax.block_until_ready(
        snetwork_forward(x_small, weights, biases, activation="lrelu",
                         param_dtype=jnp.float32))
    ref_lrelu = snetwork_reference(x_small, weights, biases, activation="lrelu")
    assert jnp.allclose(out_lrelu, ref_lrelu, atol=1e-5, rtol=1e-5)

    print("KERNEL_OK")
</pallas_src>

<mosaic_0001>
module attributes {stable_mosaic.version = 11 : i64} {
  func.func @kernel(%arg0: i32, %arg1: memref<2x8xf32, #tpu.memory_space<vmem>>, %arg2: memref<32x2xf32, #tpu.memory_space<vmem>>, %arg3: memref<3x32x1xf32, #tpu.memory_space<vmem>>, %arg4: memref<2x32x32xf32, #tpu.memory_space<vmem>>, %arg5: memref<32x2xf32, #tpu.memory_space<vmem>>, %arg6: memref<2x1xf32, #tpu.memory_space<vmem>>, %arg7: memref<2x8xf32, #tpu.memory_space<vmem>>) attributes {dimension_semantics = [#tpu.dimension_semantics<parallel>], iteration_bounds = array<i64: 1>, scalar_prefetch = 0 : i64, scratch_operands = 0 : i64, tpu.core_type = #tpu.core_type<tc>, window_params = [{transform_indices = @transform_0, window_bounds = array<i64: 2, 8>}, {pipeline_mode = #tpu.pipeline_mode<synchronous>, transform_indices = @transform_1, window_bounds = array<i64: 32, 2>}, {pipeline_mode = #tpu.pipeline_mode<synchronous>, transform_indices = @transform_2, window_bounds = array<i64: 3, 32, 1>}, {pipeline_mode = #tpu.pipeline_mode<synchronous>, transform_indices = @transform_3, window_bounds = array<i64: 2, 32, 32>}, {pipeline_mode = #tpu.pipeline_mode<synchronous>, transform_indices = @transform_4, window_bounds = array<i64: 32, 2>}, {pipeline_mode = #tpu.pipeline_mode<synchronous>, transform_indices = @transform_5, window_bounds = array<i64: 2, 1>}, {transform_indices = @transform_6, window_bounds = array<i64: 2, 8>}]} {
    %c0 = arith.constant 0 : index
    %c0_0 = arith.constant 0 : index
    %0 = vector.load %arg1[%c0, %c0_0] : memref<2x8xf32, #tpu.memory_space<vmem>>, vector<2x8xf32>
    %c0_1 = arith.constant 0 : index
    %c0_2 = arith.constant 0 : index
    %1 = vector.load %arg2[%c0_1, %c0_2] : memref<32x2xf32, #tpu.memory_space<vmem>>, vector<32x2xf32>
    %2 = vector.extract_strided_slice %1 {offsets = [0, 0], sizes = [32, 1], strides = [1, 1]} : vector<32x2xf32> to vector<32x1xf32>
    %3 = vector.extract_strided_slice %0 {offsets = [0, 0], sizes = [1, 8], strides = [1, 1]} : vector<2x8xf32> to vector<1x8xf32>
    %4 = vector.broadcast %2 : vector<32x1xf32> to vector<32x8xf32>
    %5 = vector.broadcast %3 : vector<1x8xf32> to vector<32x8xf32>
    %6 = arith.mulf %4, %5 : vector<32x8xf32>
    %7 = vector.extract_strided_slice %1 {offsets = [0, 1], sizes = [32, 1], strides = [1, 1]} : vector<32x2xf32> to vector<32x1xf32>
    %8 = vector.extract_strided_slice %0 {offsets = [1, 0], sizes = [1, 8], strides = [1, 1]} : vector<2x8xf32> to vector<1x8xf32>
    %9 = vector.broadcast %7 : vector<32x1xf32> to vector<32x8xf32>
    %10 = vector.broadcast %8 : vector<1x8xf32> to vector<32x8xf32>
    %11 = arith.mulf %9, %10 : vector<32x8xf32>
    %12 = arith.addf %6, %11 : vector<32x8xf32>
    %c0_3 = arith.constant 0 : index
    %c0_4 = arith.constant 0 : index
    %c0_5 = arith.constant 0 : index
    %13 = vector.load %arg3[%c0_3, %c0_4, %c0_5] : memref<3x32x1xf32, #tpu.memory_space<vmem>>, vector<1x32x1xf32>
    %14 = vector.shape_cast %13 : vector<1x32x1xf32> to vector<32x1xf32>
    %15 = vector.broadcast %14 : vector<32x1xf32> to vector<32x8xf32>
    %16 = arith.addf %12, %15 : vector<32x8xf32>
    %cst = arith.constant 0.000000e+00 : f32
    %17 = vector.broadcast %cst : f32 to vector<32x8xf32>
    %18 = arith.maximumf %16, %17 : vector<32x8xf32>
    %c0_6 = arith.constant 0 : index
    %c0_7 = arith.constant 0 : index
    %c0_8 = arith.constant 0 : index
    %19 = vector.load %arg4[%c0_6, %c0_7, %c0_8] : memref<2x32x32xf32, #tpu.memory_space<vmem>>, vector<1x32x32xf32>
    %20 = vector.shape_cast %19 : vector<1x32x32xf32> to vector<32x32xf32>
    %cst_9 = arith.constant dense<0.000000e+00> : vector<32x8xf32>
    %21 = tpu.matmul %20, %18, %cst_9 {dimension_numbers = #tpu.dot_dimension_numbers<[1], [0], [0], [1], [0, 0, 1, 1], [], []>} : vector<32x32xf32>, vector<32x8xf32>, vector<32x8xf32> -> vector<32x8xf32>
    %c1 = arith.constant 1 : index
    %c0_10 = arith.constant 0 : index
    %c0_11 = arith.constant 0 : index
    %22 = vector.load %arg3[%c1, %c0_10, %c0_11] : memref<3x32x1xf32, #tpu.memory_space<vmem>>, vector<1x32x1xf32>
    %23 = vector.shape_cast %22 : vector<1x32x1xf32> to vector<32x1xf32>
    %24 = vector.broadcast %23 : vector<32x1xf32> to vector<32x8xf32>
    %25 = arith.addf %21, %24 : vector<32x8xf32>
    %cst_12 = arith.constant 0.000000e+00 : f32
    %26 = vector.broadcast %cst_12 : f32 to vector<32x8xf32>
    %27 = arith.maximumf %25, %26 : vector<32x8xf32>
    %c1_13 = arith.constant 1 : index
    %c0_14 = arith.constant 0 : index
    %c0_15 = arith.constant 0 : index
    %28 = vector.load %arg4[%c1_13, %c0_14, %c0_15] : memref<2x32x32xf32, #tpu.memory_space<vmem>>, vector<1x32x32xf32>
    %29 = vector.shape_cast %28 : vector<1x32x32xf32> to vector<32x32xf32>
    %cst_16 = arith.constant dense<0.000000e+00> : vector<32x8xf32>
    %30 = tpu.matmul %29, %27, %cst_16 {dimension_numbers = #tpu.dot_dimension_numbers<[1], [0], [0], [1], [0, 0, 1, 1], [], []>} : vector<32x32xf32>, vector<32x8xf32>, vector<32x8xf32> -> vector<32x8xf32>
    %c2 = arith.constant 2 : index
    %c0_17 = arith.constant 0 : index
    %c0_18 = arith.constant 0 : index
    %31 = vector.load %arg3[%c2, %c0_17, %c0_18] : memref<3x32x1xf32, #tpu.memory_space<vmem>>, vector<1x32x1xf32>
    %32 = vector.shape_cast %31 : vector<1x32x1xf32> to vector<32x1xf32>
    %33 = vector.broadcast %32 : vector<32x1xf32> to vector<32x8xf32>
    %34 = arith.addf %30, %33 : vector<32x8xf32>
    %cst_19 = arith.constant 0.000000e+00 : f32
    %35 = vector.broadcast %cst_19 : f32 to vector<32x8xf32>
    %36 = arith.maximumf %34, %35 : vector<32x8xf32>
    %c0_20 = arith.constant 0 : index
    %c0_21 = arith.constant 0 : index
    %37 = vector.load %arg5[%c0_20, %c0_21] : memref<32x2xf32, #tpu.memory_space<vmem>>, vector<32x2xf32>
    %38 = vector.extract_strided_slice %37 {offsets = [0, 0], sizes = [32, 1], strides = [1, 1]} : vector<32x2xf32> to vector<32x1xf32>
    %39 = vector.broadcast %38 : vector<32x1xf32> to vector<32x8xf32>
    %40 = arith.mulf %36, %39 : vector<32x8xf32>
    %cst_22 = arith.constant dense<0.000000e+00> : vector<8xf32>
    %41 = vector.multi_reduction <add>, %40, %cst_22 [0] : vector<32x8xf32> to vector<8xf32>
    %42 = vector.shape_cast %41 : vector<8xf32> to vector<1x8xf32>
    %43 = vector.extract_strided_slice %37 {offsets = [0, 1], sizes = [32, 1], strides = [1, 1]} : vector<32x2xf32> to vector<32x1xf32>
    %44 = vector.broadcast %43 : vector<32x1xf32> to vector<32x8xf32>
    %45 = arith.mulf %36, %44 : vector<32x8xf32>
    %cst_23 = arith.constant dense<0.000000e+00> : vector<8xf32>
    %46 = vector.multi_reduction <add>, %45, %cst_23 [0] : vector<32x8xf32> to vector<8xf32>
    %47 = vector.shape_cast %46 : vector<8xf32> to vector<1x8xf32>
    %48 = tpu.concatenate %42, %47 in 0 : vector<1x8xf32>, vector<1x8xf32> -> vector<2x8xf32>
    %c0_24 = arith.constant 0 : index
    %c0_25 = arith.constant 0 : index
    %49 = vector.load %arg6[%c0_24, %c0_25] : memref<2x1xf32, #tpu.memory_space<vmem>>, vector<2x1xf32>
    %50 = vector.broadcast %49 : vector<2x1xf32> to vector<2x8xf32>
    %51 = arith.addf %48, %50 : vector<2x8xf32>
    %52 = math.tanh %51 : vector<2x8xf32>
    %c0_26 = arith.constant 0 : index
    %c0_27 = arith.constant 0 : index
    %53 = vector.load %arg7[%c0_26, %c0_27] : memref<2x8xf32, #tpu.memory_space<vmem>>, vector<2x8xf32>
    tpu.vector_store %arg7[%c0_26, %c0_27], %52 {strides = array<i32>} : memref<2x8xf32, #tpu.memory_space<vmem>>, vector<2x8xf32>,
    return
  }
  func.func @transform_0(%arg0: i32) -> (i32, i32) {
    %c0_i32 = arith.constant 0 : i32
    %c0_i32_0 = arith.constant 0 : i32
    return %c0_i32, %arg0 : i32, i32
  }
  func.func @transform_1(%arg0: i32) -> (i32, i32) {
    %c0_i32 = arith.constant 0 : i32
    %c0_i32_0 = arith.constant 0 : i32
    %c0_i32_1 = arith.constant 0 : i32
    return %c0_i32, %c0_i32_0 : i32, i32
  }
  func.func @transform_2(%arg0: i32) -> (i32, i32, i32) {
    %c0_i32 = arith.constant 0 : i32
    %c0_i32_0 = arith.constant 0 : i32
    %c0_i32_1 = arith.constant 0 : i32
    %c0_i32_2 = arith.constant 0 : i32
    return %c0_i32, %c0_i32_0, %c0_i32_1 : i32, i32, i32
  }
  func.func @transform_3(%arg0: i32) -> (i32, i32, i32) {
    %c0_i32 = arith.constant 0 : i32
    %c0_i32_0 = arith.constant 0 : i32
    %c0_i32_1 = arith.constant 0 : i32
    %c0_i32_2 = arith.constant 0 : i32
    return %c0_i32, %c0_i32_0, %c0_i32_1 : i32, i32, i32
  }
  func.func @transform_4(%arg0: i32) -> (i32, i32) {
    %c0_i32 = arith.constant 0 : i32
    %c0_i32_0 = arith.constant 0 : i32
    %c0_i32_1 = arith.constant 0 : i32
    return %c0_i32, %c0_i32_0 : i32, i32
  }
  func.func @transform_5(%arg0: i32) -> (i32, i32) {
    %c0_i32 = arith.constant 0 : i32
    %c0_i32_0 = arith.constant 0 : i32
    %c0_i32_1 = arith.constant 0 : i32
    return %c0_i32, %c0_i32_0 : i32, i32
  }
  func.func @transform_6(%arg0: i32) -> (i32, i32) {
    %c0_i32 = arith.constant 0 : i32
    %c0_i32_0 = arith.constant 0 : i32
    return %c0_i32, %arg0 : i32, i32
  }
}

</mosaic_0001>

<llo_original>
// kernel: tpu_custom_call.1
$region0: #{tpu_custom_call.1}
  #allocation0 [shape = 'u32[]', space=smem, size = 0x4, offset = 0x4, fixed_abs, tag = 'smem constant byte address 0x4 - core index']
  #allocation1 [shape = 'u32[144,128]{1,0:T(1,128)}', space=vmem, size = 0x12000, scoped, tag = 'internal scratch']
  %s0 = inlined_call_operand.vmem [shape: f32[2,8], index: 0, kind: input, shape index: {}]
  %s1 = inlined_call_operand.vmem [shape: f32[32,2], index: 1, kind: input, shape index: {}]
  %s2 = inlined_call_operand.vmem [shape: f32[3,32,1], index: 2, kind: input, shape index: {}]
  %s3 = inlined_call_operand.vmem [shape: f32[2,32,32], index: 3, kind: input, shape index: {}]
  %s4 = inlined_call_operand.vmem [shape: f32[32,2], index: 4, kind: input, shape index: {}]
  %s5 = inlined_call_operand.vmem [shape: f32[2,1], index: 5, kind: input, shape index: {}]
  %s6 = inlined_call_operand.hbm [shape: f32[2,8], index: 6, kind: output, shape index: {}]
  %s7 = sld [smem:[#allocation0]]
  $region34: #{tpu_custom_call.1} parent=0
    _
  %s9 = ssub.s32 1, %s7
  %s10 = scalar_select 0, %s9, %s7
  $region1: #{tpu_custom_call.1} parent=0
    #allocation2 [shape = 'u8[1024]{0}', space=vmem, size = 0x400, scoped, tag = 'output window, operand 0, single buffered']
    #allocation3 [shape = 's32[1]{0}', space=sflag, size = 0x4, scoped, tag = 'scoped memory for tpu_custom_call.1']
    %11 = vsyncpa [#allocation3], 0
    // Predicated region
    $region2: #{tpu_custom_call.1} parent=1 // pred_check
      _
    $region3: #{tpu_custom_call.1} parent=1 // pred_check_branch
      %13 = sbr.rel (0) target = $region5
    $region4: #{tpu_custom_call.1} parent=1 // pred_region
      _
    $region5: #{tpu_custom_call.1} parent=1 // pred_fallthru
      _
    // Predicated region
    $region6: #{tpu_custom_call.1} parent=1 // pred_check
      _
    $region7: #{tpu_custom_call.1} parent=1 // pred_check_branch
      %15 = sbr.rel (0) target = $region9
    $region8: #{tpu_custom_call.1} parent=1 // pred_region
      _
    $region9: #{tpu_custom_call.1} parent=1 // pred_fallthru
      _
    // Predicated region
    $region10: #{tpu_custom_call.1} parent=1 // pred_check
      _
    $region11: #{tpu_custom_call.1} parent=1 // pred_check_branch
      %17 = sbr.rel (0) target = $region13
    $region12: #{tpu_custom_call.1} parent=1 // pred_region
      _
    $region13: #{tpu_custom_call.1} parent=1 // pred_fallthru
      _
    // Predicated region
    $region14: #{tpu_custom_call.1} parent=1 // pred_check
      _
    $region15: #{tpu_custom_call.1} parent=1 // pred_check_branch
      %19 = sbr.rel (0) target = $region17
    $region16: #{tpu_custom_call.1} parent=1 // pred_region
      _
    $region17: #{tpu_custom_call.1} parent=1 // pred_fallthru
      _
    // Predicated region
    $region18: #{tpu_custom_call.1} parent=1 // pred_check
      _
    $region19: #{tpu_custom_call.1} parent=1 // pred_check_branch
      %21 = sbr.rel (0) target = $region21
    $region20: #{tpu_custom_call.1} parent=1 // pred_region
      _
    $region21: #{tpu_custom_call.1} parent=1 // pred_fallthru
      _
    // Predicated region
    $region22: #{tpu_custom_call.1} parent=1 // pred_check
      _
    $region23: #{tpu_custom_call.1} parent=1 // pred_check_branch
      %23 = sbr.rel (0) target = $region25
    $region24: #{tpu_custom_call.1} parent=1 // pred_region
      _
    $region25: #{tpu_custom_call.1} parent=1 // pred_fallthru
      _
    %v24 = vld [vmem:[%s0] sm:$0x3]
    %v25 = vld [vmem:[%s1] sm:$0xff]
    %v26 = vld [vmem:[%s1 + $0x8] sm:$0xff]
    %v27 = vld [vmem:[%s1 + $0x10] sm:$0xff]
    %v28 = vld [vmem:[%s1 + $0x18] sm:$0xff]
    %30 = vset.pattern.permute.xlu0 0
    %31 = vperm.xlu0 %30, %v25
    %v32 = vpop.permute.xlu0 %31
    %35 = vset.pattern.permute.xlu0 0
    %36 = vperm.xlu0 %35, %v26
    %v37 = vpop.permute.xlu0 %36
    %40 = vset.pattern.permute.xlu0 0
    %41 = vperm.xlu0 %40, %v27
    %v42 = vpop.permute.xlu0 %41
    %45 = vset.pattern.permute.xlu0 0
    %46 = vperm.xlu0 %45, %v28
    %v47 = vpop.permute.xlu0 %46
    %v49 = vlaneseq
    %v50 = vshrl.u32 %v49, 7
    %v51 = vsub.s32 0, %v50
    %v52 = vrot.slane %v24, %v51
    %v53 = vmul.f32 %v32, %v52
    %v54 = vmul.f32 %v37, %v52
    %v55 = vmul.f32 %v42, %v52
    %v56 = vmul.f32 %v47, %v52
    %57 = vset.pattern.permute.xlu0 1
    %58 = vperm.xlu0 %57, %v25
    %v59 = vpop.permute.xlu0 %58
    %61 = vset.pattern.permute.xlu0 1
    %62 = vperm.xlu0 %61, %v26
    %v63 = vpop.permute.xlu0 %62
    %65 = vset.pattern.permute.xlu0 1
    %66 = vperm.xlu0 %65, %v27
    %v67 = vpop.permute.xlu0 %66
    %69 = vset.pattern.permute.xlu0 1
    %70 = vperm.xlu0 %69, %v28
    %v71 = vpop.permute.xlu0 %70
    %v73 = vlaneseq
    %v74 = vshrl.u32 %v73, 7
    %v75 = vsub.s32 1, %v74
    %v76 = vrot.slane %v24, %v75
    %v77 = vmul.f32 %v59, %v76
    %v78 = vmul.f32 %v63, %v76
    %v79 = vmul.f32 %v67, %v76
    %v80 = vmul.f32 %v71, %v76
    %v81 = vadd.f32 %v53, %v77
    %v82 = vadd.f32 %v54, %v78
    %v83 = vadd.f32 %v55, %v79
    %v84 = vadd.f32 %v56, %v80
    %v85 = vld [vmem:[%s2] sm:$0xff]
    %v86 = vld [vmem:[%s2 + $0x8] sm:$0xff]
    %v87 = vld [vmem:[%s2 + $0x10] sm:$0xff]
    %v88 = vld [vmem:[%s2 + $0x18] sm:$0xff]
    %90 = vset.pattern.permute.xlu0 0
    %91 = vperm.xlu0 %90, %v85
    %v92 = vpop.permute.xlu0 %91
    %95 = vset.pattern.permute.xlu0 0
    %96 = vperm.xlu0 %95, %v86
    %v97 = vpop.permute.xlu0 %96
    %100 = vset.pattern.permute.xlu0 0
    %101 = vperm.xlu0 %100, %v87
    %v102 = vpop.permute.xlu0 %101
    %105 = vset.pattern.permute.xlu0 0
    %106 = vperm.xlu0 %105, %v88
    %v107 = vpop.permute.xlu0 %106
    %v109 = vadd.f32 %v81, %v92
    %v110 = vadd.f32 %v82, %v97
    %v111 = vadd.f32 %v83, %v102
    %v112 = vadd.f32 %v84, %v107
    %v113 = vmax.f32 %v109, 0.0
    %v114 = vmax.f32 %v110, 0.0
    %v115 = vmax.f32 %v111, 0.0
    %v116 = vmax.f32 %v112, 0.0
    %v117 = vld [vmem:[%s3] sm:$0xff]
    %v118 = vld [vmem:[%s3 + $0x8] sm:$0xff]
    %v119 = vld [vmem:[%s3 + $0x10] sm:$0xff]
    %v120 = vld [vmem:[%s3 + $0x18] sm:$0xff]
    %s121 = scalar_lea.vmem %s2, 32
    %v122 = vld [vmem:[%s121] sm:$0xff]
    %v123 = vld [vmem:[%s121 + $0x8] sm:$0xff]
    %v124 = vld [vmem:[%s121 + $0x10] sm:$0xff]
    %v125 = vld [vmem:[%s121 + $0x18] sm:$0xff]
    %127 = vset.pattern.permute.xlu0 0
    %128 = vperm.xlu0 %127, %v122
    %v129 = vpop.permute.xlu0 %128
    %132 = vset.pattern.permute.xlu0 0
    %133 = vperm.xlu0 %132, %v123
    %v134 = vpop.permute.xlu0 %133
    %137 = vset.pattern.permute.xlu0 0
    %138 = vperm.xlu0 %137, %v124
    %v139 = vpop.permute.xlu0 %138
    %142 = vset.pattern.permute.xlu0 0
    %143 = vperm.xlu0 %142, %v125
    %v144 = vpop.permute.xlu0 %143
    %vm146 = vcmask 261120
    %v148 = vsel %vm146, %v117, 0
    %v151 = vsel %vm146, %v118, 0
    %v154 = vsel %vm146, %v119, 0
    %v157 = vsel %vm146, %v120, 0
    %159 = vmatprep.subr.mxu0 0.0
    %160 = vmatpush1.msra.mxu0 %v113
    %161 = vmatprep.subr.mxu0 0.0
    %162 = vmatpush1.msra.mxu0 %v114
    %163 = vmatprep.subr.mxu0 0.0
    %164 = vmatpush1.msra.mxu0 %v115
    %165 = vmatprep.subr.mxu0 0.0
    %166 = vmatpush1.msra.mxu0 %v116
    %167 = vmatprep.subr.mxu0 0.0
    %168 = vmatpush1.msra.mxu0 0.0
    %169 = vmatprep.subr.mxu0 0.0
    %170 = vmatpush1.msra.mxu0 0.0
    %171 = vmatprep.subr.mxu0 0.0
    %172 = vmatpush1.msra.mxu0 0.0
    %173 = vmatprep.subr.mxu0 0.0
    %174 = vmatpush1.msra.mxu0 0.0
    %175 = vmatprep.subr.mxu0 0.0
    %176 = vmatpush1.msra.mxu0 0.0
    %177 = vmatprep.subr.mxu0 0.0
    %178 = vmatpush1.msra.mxu0 0.0
    %179 = vmatprep.subr.mxu0 0.0
    %180 = vmatpush1.msra.mxu0 0.0
    %181 = vmatprep.subr.mxu0 0.0
    %182 = vmatpush1.msra.mxu0 0.0
    %183 = vmatprep.subr.mxu0 0.0
    %184 = vmatpush1.msra.mxu0 0.0
    %185 = vmatprep.subr.mxu0 0.0
    %186 = vmatpush1.msra.mxu0 0.0
    %187 = vmatprep.subr.mxu0 0.0
    %188 = vmatpush1.msra.mxu0 0.0
    %189 = vmatprep.subr.mxu0 0.0
    %190 = vmatpush1.msra.mxu0 0.0
    %191 = vmatprep.subr.mxu0 0.0
    %192 = vmatpush1.msra.mxu0 0.0
    %193 = vmatprep.subr.mxu0 0.0
    %194 = vmatpush1.msra.mxu0 0.0
    %195 = vmatprep.subr.mxu0 0.0
    %196 = vmatpush1.msra.mxu0 0.0
    %197 = vmatprep.subr.mxu0 0.0
    %198 = vmatpush1.msra.mxu0 0.0
    %199 = vmatprep.subr.mxu0 0.0
    %200 = vmatpush1.msra.mxu0 0.0
    %201 = vmatprep.subr.mxu0 0.0
    %202 = vmatpush1.msra.mxu0 0.0
    %203 = vmatprep.subr.mxu0 0.0
    %204 = vmatpush1.msra.mxu0 0.0
    %205 = vmatprep.subr.mxu0 0.0
    %206 = vmatpush1.msra.mxu0 0.0
    %207 = vmatprep.subr.mxu0 0.0
    %208 = vmatpush1.msra.mxu0 0.0
    %209 = vmatprep.subr.mxu0 0.0
    %210 = vmatpush1.msra.mxu0 0.0
    %211 = vmatprep.subr.mxu0 0.0
    %212 = vmatpush1.msra.mxu0 0.0
    %213 = vmatprep.subr.mxu0 0.0
    %214 = vmatpush1.msra.mxu0 0.0
    %215 = vmatprep.subr.mxu0 0.0
    %216 = vmatpush1.msra.mxu0 0.0
    %217 = vmatprep.subr.mxu0 0.0
    %218 = vmatpush1.msra.mxu0 0.0
    %219 = vmatprep.subr.mxu0 0.0
    %220 = vmatpush1.msra.mxu0 0.0
    %221 = vmatprep.subr.mxu0 0.0
    %222 = vmatpush1.msra.mxu0 0.0
    %223 = vmatprep.mubr.f32.mxu0 0.0
    %224 = vmatmul.mubr.f32.gmra.mrb[0].mxu0 %v148
    %v225 = vpop.f32.mrb[0].mxu0
    %v226 = vadd.f32 %v129, %v225
    %v227 = vpop.f32.mrb[0].mxu0
    %228 = vmatprep.mubr.f32.mxu0 0.0
    %229 = vmatmul.mubr.f32.gmra.mrb[0].mxu0 %v151
    %v230 = vpop.f32.mrb[0].mxu0
    %v231 = vadd.f32 %v134, %v230
    %v232 = vpop.f32.mrb[0].mxu0
    %233 = vmatprep.mubr.f32.mxu0 0.0
    %234 = vmatmul.mubr.f32.gmra.mrb[0].mxu0 %v154
    %v235 = vpop.f32.mrb[0].mxu0
    %v236 = vadd.f32 %v139, %v235
    %v237 = vpop.f32.mrb[0].mxu0
    %238 = vmatprep.mubr.f32.mxu0 0.0
    %239 = vmatmul.mubr.f32.gmra.mrb[0].mxu0 %v157
    %v240 = vpop.f32.mrb[0].mxu0
    %v241 = vadd.f32 %v144, %v240
    %v242 = vpop.f32.mrb[0].mxu0
    %243 = vdwg.mxu0
    %v244 = vmax.f32 %v226, 0.0
    %v245 = vmax.f32 %v231, 0.0
    %v246 = vmax.f32 %v236, 0.0
    %v247 = vmax.f32 %v241, 0.0
    %s248 = scalar_lea.vmem %s3, 32
    %v249 = vld [vmem:[%s248] sm:$0xff]
    %v250 = vld [vmem:[%s248 + $0x8] sm:$0xff]
    %v251 = vld [vmem:[%s248 + $0x10] sm:$0xff]
    %v252 = vld [vmem:[%s248 + $0x18] sm:$0xff]
    %s253 = scalar_lea.vmem %s2, 64
    %v254 = vld [vmem:[%s253] sm:$0xff]
    %v255 = vld [vmem:[%s253 + $0x8] sm:$0xff]
    %v256 = vld [vmem:[%s253 + $0x10] sm:$0xff]
    %v257 = vld [vmem:[%s253 + $0x18] sm:$0xff]
    %259 = vset.pattern.permute.xlu0 0
    %260 = vperm.xlu0 %259, %v254
    %v261 = vpop.permute.xlu0 %260
    %264 = vset.pattern.permute.xlu0 0
    %265 = vperm.xlu0 %264, %v255
    %v266 = vpop.permute.xlu0 %265
    %269 = vset.pattern.permute.xlu0 0
    %270 = vperm.xlu0 %269, %v256
    %v271 = vpop.permute.xlu0 %270
    %274 = vset.pattern.permute.xlu0 0
    %275 = vperm.xlu0 %274, %v257
    %v276 = vpop.permute.xlu0 %275
    %v279 = vsel %vm146, %v249, 0
    %v282 = vsel %vm146, %v250, 0
    %v285 = vsel %vm146, %v251, 0
    %v288 = vsel %vm146, %v252, 0
    %290 = vmatprep.subr.mxu0 0.0
    %291 = vmatpush1.msra.mxu0 %v244
    %292 = vmatprep.subr.mxu0 0.0
    %293 = vmatpush1.msra.mxu0 %v245
    %294 = vmatprep.subr.mxu0 0.0
    %295 = vmatpush1.msra.mxu0 %v246
    %296 = vmatprep.subr.mxu0 0.0
    %297 = vmatpush1.msra.mxu0 %v247
    %298 = vmatprep.subr.mxu0 0.0
    %299 = vmatpush1.msra.mxu0 0.0
    %300 = vmatprep.subr.mxu0 0.0
    %301 = vmatpush1.msra.mxu0 0.0
    %302 = vmatprep.subr.mxu0 0.0
    %303 = vmatpush1.msra.mxu0 0.0
    %304 = vmatprep.subr.mxu0 0.0
    %305 = vmatpush1.msra.mxu0 0.0
    %306 = vmatprep.subr.mxu0 0.0
    %307 = vmatpush1.msra.mxu0 0.0
    %308 = vmatprep.subr.mxu0 0.0
    %309 = vmatpush1.msra.mxu0 0.0
    %310 = vmatprep.subr.mxu0 0.0
    %311 = vmatpush1.msra.mxu0 0.0
    %312 = vmatprep.subr.mxu0 0.0
    %313 = vmatpush1.msra.mxu0 0.0
    %314 = vmatprep.subr.mxu0 0.0
    %315 = vmatpush1.msra.mxu0 0.0
    %316 = vmatprep.subr.mxu0 0.0
    %317 = vmatpush1.msra.mxu0 0.0
    %318 = vmatprep.subr.mxu0 0.0
    %319 = vmatpush1.msra.mxu0 0.0
    %320 = vmatprep.subr.mxu0 0.0
    %321 = vmatpush1.msra.mxu0 0.0
    %322 = vmatprep.subr.mxu0 0.0
    %323 = vmatpush1.msra.mxu0 0.0
    %324 = vmatprep.subr.mxu0 0.0
    %325 = vmatpush1.msra.mxu0 0.0
    %326 = vmatprep.subr.mxu0 0.0
    %327 = vmatpush1.msra.mxu0 0.0
    %328 = vmatprep.subr.mxu0 0.0
    %329 = vmatpush1.msra.mxu0 0.0
    %330 = vmatprep.subr.mxu0 0.0
    %331 = vmatpush1.msra.mxu0 0.0
    %332 = vmatprep.subr.mxu0 0.0
    %333 = vmatpush1.msra.mxu0 0.0
    %334 = vmatprep.subr.mxu0 0.0
    %335 = vmatpush1.msra.mxu0 0.0
    %336 = vmatprep.subr.mxu0 0.0
    %337 = vmatpush1.msra.mxu0 0.0
    %338 = vmatprep.subr.mxu0 0.0
    %339 = vmatpush1.msra.mxu0 0.0
    %340 = vmatprep.subr.mxu0 0.0
    %341 = vmatpush1.msra.mxu0 0.0
    %342 = vmatprep.subr.mxu0 0.0
    %343 = vmatpush1.msra.mxu0 0.0
    %344 = vmatprep.subr.mxu0 0.0
    %345 = vmatpush1.msra.mxu0 0.0
    %346 = vmatprep.subr.mxu0 0.0
    %347 = vmatpush1.msra.mxu0 0.0
    %348 = vmatprep.subr.mxu0 0.0
    %349 = vmatpush1.msra.mxu0 0.0
    %350 = vmatprep.subr.mxu0 0.0
    %351 = vmatpush1.msra.mxu0 0.0
    %352 = vmatprep.subr.mxu0 0.0
    %353 = vmatpush1.msra.mxu0 0.0
    %354 = vmatprep.mubr.f32.mxu0 0.0
    %355 = vmatmul.mubr.f32.gmra.mrb[0].mxu0 %v279
    %v356 = vpop.f32.mrb[0].mxu0
    %v357 = vadd.f32 %v261, %v356
    %v358 = vpop.f32.mrb[0].mxu0
    %359 = vmatprep.mubr.f32.mxu0 0.0
    %360 = vmatmul.mubr.f32.gmra.mrb[0].mxu0 %v282
    %v361 = vpop.f32.mrb[0].mxu0
    %v362 = vadd.f32 %v266, %v361
    %v363 = vpop.f32.mrb[0].mxu0
    %364 = vmatprep.mubr.f32.mxu0 0.0
    %365 = vmatmul.mubr.f32.gmra.mrb[0].mxu0 %v285
    %v366 = vpop.f32.mrb[0].mxu0
    %v367 = vadd.f32 %v271, %v366
    %v368 = vpop.f32.mrb[0].mxu0
    %369 = vmatprep.mubr.f32.mxu0 0.0
    %370 = vmatmul.mubr.f32.gmra.mrb[0].mxu0 %v288
    %v371 = vpop.f32.mrb[0].mxu0
    %v372 = vadd.f32 %v276, %v371
    %v373 = vpop.f32.mrb[0].mxu0
    %374 = vdwg.mxu0
    %v375 = vmax.f32 %v357, 0.0
    %v376 = vmax.f32 %v362, 0.0
    %v377 = vmax.f32 %v367, 0.0
    %v378 = vmax.f32 %v372, 0.0
    %v379 = vld [vmem:[%s4] sm:$0xff]
    %v380 = vld [vmem:[%s4 + $0x8] sm:$0xff]
    %v381 = vld [vmem:[%s4 + $0x10] sm:$0xff]
    %v382 = vld [vmem:[%s4 + $0x18] sm:$0xff]
    %384 = vset.pattern.permute.xlu0 0
    %385 = vperm.xlu0 %384, %v379
    %v386 = vpop.permute.xlu0 %385
    %389 = vset.pattern.permute.xlu0 0
    %390 = vperm.xlu0 %389, %v380
    %v391 = vpop.permute.xlu0 %390
    %394 = vset.pattern.permute.xlu0 0
    %395 = vperm.xlu0 %394, %v381
    %v396 = vpop.permute.xlu0 %395
    %399 = vset.pattern.permute.xlu0 0
    %400 = vperm.xlu0 %399, %v382
    %v401 = vpop.permute.xlu0 %400
    %v403 = vmul.f32 %v375, %v386
    %v404 = vmul.f32 %v376, %v391
    %v405 = vmul.f32 %v377, %v396
    %v406 = vmul.f32 %v378, %v401
    %vm407 = vcmask 64512
    %v408 = vsel %vm407, %v403, 0.0
    %v409 = vsel %vm407, %v404, 0.0
    %v410 = vadd.f32 %v408, %v409
    %v411 = vsel %vm407, %v405, 0.0
    %v412 = vadd.f32 %v410, %v411
    %v413 = vsel %vm407, %v406, 0.0
    %v414 = vadd.f32 %v412, %v413
    %v415 = vrot.slane %v414, 4
    %v416 = vadd.f32 %v414, %v415
    %v417 = vrot.slane %v416, 2
    %v418 = vadd.f32 %v416, %v417
    %v419 = vrot.slane %v418, 1
    %v420 = vadd.f32 %v418, %v419
    %421 = vset.pattern.permute.xlu0 1
    %422 = vperm.xlu0 %421, %v379
    %v423 = vpop.permute.xlu0 %422
    %425 = vset.pattern.permute.xlu0 1
    %426 = vperm.xlu0 %425, %v380
    %v427 = vpop.permute.xlu0 %426
    %429 = vset.pattern.permute.xlu0 1
    %430 = vperm.xlu0 %429, %v381
    %v431 = vpop.permute.xlu0 %430
    %433 = vset.pattern.permute.xlu0 1
    %434 = vperm.xlu0 %433, %v382
    %v435 = vpop.permute.xlu0 %434
    %v437 = vmul.f32 %v375, %v423
    %v438 = vmul.f32 %v376, %v427
    %v439 = vmul.f32 %v377, %v431
    %v440 = vmul.f32 %v378, %v435
    %v441 = vsel %vm407, %v437, 0.0
    %v442 = vsel %vm407, %v438, 0.0
    %v443 = vadd.f32 %v441, %v442
    %v444 = vsel %vm407, %v439, 0.0
    %v445 = vadd.f32 %v443, %v444
    %v446 = vsel %vm407, %v440, 0.0
    %v447 = vadd.f32 %v445, %v446
    %v448 = vrot.slane %v447, 4
    %v449 = vadd.f32 %v447, %v448
    %v450 = vrot.slane %v449, 2
    %v451 = vadd.f32 %v449, %v450
    %v452 = vrot.slane %v451, 1
    %v453 = vadd.f32 %v451, %v452
    %vm454 = vcmask 1040384
    %v455 = vsel %vm454, %v420, %v453
    %v456 = vld [vmem:[%s5] sm:$0x3]
    %458 = vset.pattern.permute.xlu0 0
    %459 = vperm.xlu0 %458, %v456
    %v460 = vpop.permute.xlu0 %459
    %v462 = vadd.f32 %v455, %v460
    %v463 = vtanh.pop %v462
    %vm464 = vcmask 58368
    %465 = vst.msk [vmem:[#allocation2] sm:$0x3] %vm464, %v463
    // Predicated region
    $region26: #{tpu_custom_call.1} parent=1 // pred_check
      _
    $region27: #{tpu_custom_call.1} parent=1 // pred_check_branch
      %467 = sbr.rel (0) target = $region29
    $region28: #{tpu_custom_call.1} parent=1 // pred_region
      %s469 = ssub.s32 32, 32
      %470 = vsyncadd [#allocation3], %s469
      %s472 = sshll.u32 [#allocation2], 4
      %s473 = int_to_ptr.vmem [resolvable:$true] %s472
      %475 = dma.vmem_to_hbm [thread:$0]  %s473, 32, %s6, [#allocation3]
    $region29: #{tpu_custom_call.1} parent=1 // pred_fallthru
      _
    // Predicated region
    $region30: #{tpu_custom_call.1} parent=1 // pred_check
      _
    $region31: #{tpu_custom_call.1} parent=1 // pred_check_branch
      %477 = sbr.rel (0) target = $region33
    $region32: #{tpu_custom_call.1} parent=1 // pred_region
      %478 = dma.done [#allocation3], 32
    $region33: #{tpu_custom_call.1} parent=1 // pred_fallthru
      _
    %479 = vsyncpa [#allocation3], 1

</llo_original>
